<compile_context>
chip_gen: v5e
topology: v5e:2x2
jax: 0.10.0
libtpu: 0.0.40
codegen_flags: <defaults>
</compile_context>

<pallas_src>
import functools

import jax
import jax.numpy as jnp
from jax.experimental import pallas as pl
from jax.experimental.pallas import tpu as pltpu

_LANES = 1024  # 8 sublanes * 128 lanes -> lane-dense, unmasked vst stores


def _dropout_kernel(seed_ref, x_ref, o_ref, *, threshold, scale):
    tile_r, cols = x_ref.shape
    # Global flat element index for every element of this block (tiling-invariant).
    row = jax.lax.broadcasted_iota(jnp.int32, (tile_r, cols), 0)
    col = jax.lax.broadcasted_iota(jnp.int32, (tile_r, cols), 1)
    g_row = (pl.program_id(0) * tile_r + row).astype(jnp.uint32)
    idx = g_row * jnp.uint32(cols) + col.astype(jnp.uint32)

    # Counter-based hash (lowbias32 finalizer) -> 32 approx-uniform bits / element.
    seed = seed_ref[0].astype(jnp.uint32)
    h = idx ^ (seed * jnp.uint32(0x9E3779B9))
    h = h ^ (h >> 16)
    h = h * jnp.uint32(0x7FEB352D)
    h = h ^ (h >> 15)
    h = h * jnp.uint32(0x846CA68B)
    h = h ^ (h >> 16)

    # Integer threshold compare: keep with probability keep_prob.
    keep = h < jnp.uint32(threshold)

    x = x_ref[...]
    scaled = x * jnp.asarray(scale, x.dtype)
    o_ref[...] = jnp.where(keep, scaled, jnp.zeros((), x.dtype))


def dropout_features(
    features: jax.Array,
    *,
    seed: int = 0,
    p: float = 0.5,
    training: bool = True,
    block_bytes: int = 4 * 1024 * 1024,
    donate: bool = False,
) -> jax.Array:
    """Pallas TPU dropout over an arbitrary-shaped feature array."""
    if not training or p == 0.0:
        return features                      # eval / p=0: identity (nn.Dropout)
    if p >= 1.0:
        return jnp.zeros_like(features)

    orig_shape = features.shape
    dtype = features.dtype
    total = features.size
    keep_prob = 1.0 - float(p)
    scale = 1.0 / keep_prob
    threshold = min(int(round(keep_prob * float(1 << 32))), (1 << 32) - 1)

    # Lane-dense 2-D view: flatten; pad to a multiple of 1024 only when needed.
    flat = features.reshape(-1)
    pad = (-total) % _LANES
    if pad:
        flat = jnp.pad(flat, (0, pad))
    n_rows = (total + pad) // _LANES
    x2d = flat.reshape(n_rows, _LANES)

    # Row tile: largest multiple-of-`sub` block under block_bytes; force >=2 grid
    # steps whenever possible so both v7x TensorCores get work.
    itemsize = jnp.dtype(dtype).itemsize
    sub = max(8, 32 // itemsize)             # 8 (f32), 16 (bf16), 32 (int8/fp8)
    bytes_per_row = _LANES * itemsize
    rows_fit = max(sub, (block_bytes // bytes_per_row) // sub * sub)
    tile_r = min(n_rows, rows_fit)
    if n_rows > sub:
        half = -(-n_rows // 2)
        half = -(-half // sub) * sub
        tile_r = min(tile_r, half)
    if tile_r < n_rows:
        tile_r = max(sub, (tile_r // sub) * sub)
    grid = (pl.cdiv(n_rows, tile_r),)

    seed_arr = jnp.asarray([seed], dtype=jnp.int32)
    kernel = functools.partial(_dropout_kernel, threshold=threshold, scale=scale)
    # With num_scalar_prefetch=1 the flat inputs are: 0 = seed (SMEM), 1 = features.
    io_aliases = {1: 0} if donate else {}

    out2d = pl.pallas_call(
        kernel,
        out_shape=jax.ShapeDtypeStruct((n_rows, _LANES), dtype),
        grid_spec=pltpu.PrefetchScalarGridSpec(
            num_scalar_prefetch=1,
            grid=grid,
            in_specs=[pl.BlockSpec((tile_r, _LANES), lambda i, s: (i, 0))],
            out_specs=pl.BlockSpec((tile_r, _LANES), lambda i, s: (i, 0)),
        ),
        compiler_params=pltpu.CompilerParams(
            dimension_semantics=("parallel",),
            vmem_limit_bytes=48 * 1024 * 1024,
        ),
        input_output_aliases=io_aliases,
    )(seed_arr, x2d)

    out_flat = out2d.reshape(-1)
    if pad:
        out_flat = out_flat[:total]
    return out_flat.reshape(orig_shape)


# --- Minimal Graph stand-in (the PyTorch Graph type is just a container) ---
class Graph:
    def __init__(self, features: jax.Array):
        self._features = features

    def get_features(self) -> jax.Array:
        return self._features

    def set_features(self, features: jax.Array) -> None:
        self._features = features


class Dropout:
    """JAX/Pallas equivalent of the PyTorch module (nn.Dropout(), p=0.5)."""

    def __init__(self, p: float = 0.5):
        self.p = p
        self.training = True

    def train(self, mode: bool = True):
        self.training = mode
        return self

    def eval(self):
        self.training = False
        return self

    def __call__(self, graph: Graph, *, seed: int = 0) -> Graph:
        features = graph.get_features()
        features = dropout_features(
            features, seed=seed, p=self.p, training=self.training
        )
        graph.set_features(features)
        return graph


if __name__ == "__main__":
    key = jax.random.PRNGKey(0)
    # Small graph: 200 nodes, 128-dim features.
    num_nodes, feature_dim = 200, 128
    feats = jax.random.normal(key, (num_nodes, feature_dim), dtype=jnp.float32)

    # --- training mode: run the Pallas dropout kernel ---
    module = Dropout()                       # p = 0.5, training = True
    g = module(Graph(feats), seed=0)
    out = jax.block_until_ready(g.get_features())

    assert out.shape == feats.shape and out.dtype == feats.dtype
    # Every element is either dropped (exact 0) or kept and scaled by 1/(1-p) = 2.
    valid = (out == 0.0) | (out == feats * 2.0)
    assert bool(jnp.all(valid)), "dropout output is not {0, 2*x} elementwise"
    drop_frac = float(jnp.mean(out == 0.0))
    assert 0.40 < drop_frac < 0.60, f"drop fraction {drop_frac} far from p=0.5"

    # --- tiling invariance: smaller blocks -> different grid, identical mask ---
    out_small = jax.block_until_ready(
        dropout_features(feats, seed=0, block_bytes=32 * 1024)
    )
    assert bool(jnp.all(out_small == out)), "mask changed with block size"

    # --- non-multiple-of-128 feature width (pad path stays lane-dense) ---
    feats_odd = jax.random.normal(jax.random.PRNGKey(1), (50, 37), dtype=jnp.float32)
    out_odd = jax.block_until_ready(dropout_features(feats_odd, seed=3))
    valid_odd = (out_odd == 0.0) | (out_odd == feats_odd * 2.0)
    assert bool(jnp.all(valid_odd))

    # --- eval mode: identity ---
    out_eval = module.eval()(Graph(feats)).get_features()
    assert bool(jnp.all(out_eval == feats))

    print("KERNEL_OK")
</pallas_src>

<mosaic_0001>
module attributes {stable_mosaic.version = 11 : i64} {
  func.func @_dropout_kernel(%arg0: i32, %arg1: memref<1xi32, #tpu.memory_space<smem>>, %arg2: memref<16x1024xf32, #tpu.memory_space<vmem>>, %arg3: memref<16x1024xf32, #tpu.memory_space<vmem>>) attributes {dimension_semantics = [#tpu.dimension_semantics<parallel>], iteration_bounds = array<i64: 2>, scalar_prefetch = 1 : i64, scratch_operands = 0 : i64, tpu.core_type = #tpu.core_type<tc>, window_params = [{transform_indices = @transform_0, window_bounds = array<i64: 16, 1024>}, {transform_indices = @transform_1, window_bounds = array<i64: 16, 1024>}]} {
    %0 = tpu.iota {dimensions = array<i32: 0>} : vector<16x1024xi32>
    %1 = tpu.iota {dimensions = array<i32: 1>} : vector<16x1024xi32>
    %c16_i32 = arith.constant 16 : i32
    %2 = arith.muli %arg0, %c16_i32 : i32
    %3 = vector.broadcast %2 : i32 to vector<16x1024xi32>
    %4 = arith.addi %3, %0 : vector<16x1024xi32>
    %c1024_i32 = arith.constant 1024 : i32
    %5 = vector.broadcast %c1024_i32 : i32 to vector<16x1024xi32>
    %6 = arith.muli %4, %5 : vector<16x1024xi32>
    %7 = arith.addi %6, %1 : vector<16x1024xi32>
    %c0 = arith.constant 0 : index
    %8 = memref.load %arg1[%c0] : memref<1xi32, #tpu.memory_space<smem>>
    %c-1640531527_i32 = arith.constant -1640531527 : i32
    %9 = arith.muli %8, %c-1640531527_i32 : i32
    %10 = vector.broadcast %9 : i32 to vector<16x1024xi32>
    %11 = arith.xori %7, %10 : vector<16x1024xi32>
    %c16_i32_0 = arith.constant 16 : i32
    %12 = vector.broadcast %c16_i32_0 : i32 to vector<16x1024xi32>
    %13 = arith.shrui %11, %12 : vector<16x1024xi32>
    %14 = arith.xori %11, %13 : vector<16x1024xi32>
    %c2146121005_i32 = arith.constant 2146121005 : i32
    %15 = vector.broadcast %c2146121005_i32 : i32 to vector<16x1024xi32>
    %16 = arith.muli %14, %15 : vector<16x1024xi32>
    %c15_i32 = arith.constant 15 : i32
    %17 = vector.broadcast %c15_i32 : i32 to vector<16x1024xi32>
    %18 = arith.shrui %16, %17 : vector<16x1024xi32>
    %19 = arith.xori %16, %18 : vector<16x1024xi32>
    %c-2073254261_i32 = arith.constant -2073254261 : i32
    %20 = vector.broadcast %c-2073254261_i32 : i32 to vector<16x1024xi32>
    %21 = arith.muli %19, %20 : vector<16x1024xi32>
    %c16_i32_1 = arith.constant 16 : i32
    %22 = vector.broadcast %c16_i32_1 : i32 to vector<16x1024xi32>
    %23 = arith.shrui %21, %22 : vector<16x1024xi32>
    %24 = arith.xori %21, %23 : vector<16x1024xi32>
    %c-2147483648_i32 = arith.constant -2147483648 : i32
    %25 = vector.broadcast %c-2147483648_i32 : i32 to vector<16x1024xi32>
    %26 = arith.cmpi ult, %24, %25 : vector<16x1024xi32>
    %c0_2 = arith.constant 0 : index
    %c0_3 = arith.constant 0 : index
    %27 = vector.load %arg2[%c0_2, %c0_3] : memref<16x1024xf32, #tpu.memory_space<vmem>>, vector<16x1024xf32>
    %cst = arith.constant 2.000000e+00 : f32
    %28 = vector.broadcast %cst : f32 to vector<16x1024xf32>
    %29 = arith.mulf %27, %28 : vector<16x1024xf32>
    %cst_4 = arith.constant 0.000000e+00 : f32
    %30 = vector.broadcast %cst_4 : f32 to vector<16x1024xf32>
    %31 = arith.select %26, %29, %30 : vector<16x1024xi1>, vector<16x1024xf32>
    %c0_5 = arith.constant 0 : index
    %c0_6 = arith.constant 0 : index
    %32 = vector.load %arg3[%c0_5, %c0_6] : memref<16x1024xf32, #tpu.memory_space<vmem>>, vector<16x1024xf32>
    tpu.vector_store %arg3[%c0_5, %c0_6], %31 {strides = array<i32>} : memref<16x1024xf32, #tpu.memory_space<vmem>>, vector<16x1024xf32>,
    return
  }
  func.func @transform_0(%arg0: i32, %arg1: memref<1xi32, #tpu.memory_space<smem>>) -> (i32, i32) {
    %c0_i32 = arith.constant 0 : i32
    %c0_i32_0 = arith.constant 0 : i32
    return %arg0, %c0_i32 : i32, i32
  }
  func.func @transform_1(%arg0: i32, %arg1: memref<1xi32, #tpu.memory_space<smem>>) -> (i32, i32) {
    %c0_i32 = arith.constant 0 : i32
    %c0_i32_0 = arith.constant 0 : i32
    return %arg0, %c0_i32 : i32, i32
  }
}

</mosaic_0001>

<llo_original>
// kernel: tpu_custom_call.1
$region0: #{tpu_custom_call.1}
  #allocation0 [shape = 'u32[]', space=smem, size = 0x4, offset = 0x4, fixed_abs, tag = 'smem constant byte address 0x4 - core index']
  #allocation1 [shape = 'u32[72,128]{1,0:T(1,128)}', space=vmem, size = 0x9000, scoped, tag = 'internal scratch']
  #allocation2 [shape = 's32[1]{0}', space=sflag, size = 0x4, scoped, tag = 'scoped memory for tpu_custom_call.1']
  #allocation3 [shape = 's32[1]{0:T(128)S(6)}', space=smem, size = 0x200, scoped, tag = 'prefetched SMEM operand 0']
  %s0 = inlined_call_operand.<no memory space> [shape: s32[1], index: 0, kind: input, shape index: {}]
  %s1 = inlined_call_operand.hbm [shape: f32[25,1024], index: 1, kind: input, shape index: {}]
  %s2 = inlined_call_operand.hbm [shape: f32[25,1024], index: 2, kind: output, shape index: {}]
  %s3 = sld [smem:[#allocation0]]
  $region41: #{tpu_custom_call.1} parent=0
    _
  %s5 = ssub.s32 1, %s3
  %s6 = scalar_select 0, %s5, %s3
  %7 = sst [smem:[#allocation3]] %s0
  $region1: #{tpu_custom_call.1} parent=0
    #allocation4 [shape = 'u8[131072]{0}', space=vmem, size = 0x20000, scoped, tag = 'input window, operand 1']
    #allocation5 [shape = 's32[2]{0}', space=sflag, size = 0x8, scoped, tag = 'scoped memory for tpu_custom_call.1']
    #allocation6 [shape = 's32[2]{0}', space=sflag, size = 0x8, scoped, tag = 'scoped memory for tpu_custom_call.1']
    #allocation7 [shape = 'u8[131072]{0}', space=vmem, size = 0x20000, scoped, tag = 'output window, operand 0']
    %8 = vsyncpa [#allocation5], 0
    %s9 = scalar_lea.sflag [#allocation5], 1
    %10 = vsyncpa %s9, 0
    %11 = vsyncpa [#allocation6], 0
    %s12 = scalar_lea.sflag [#allocation6], 1
    %13 = vsyncpa %s12, 0
    loop: start=0, step=1, limit=4
    $region2: #{tpu_custom_call.1} parent=1 // loop_pre_header
      _
    $region3: #{tpu_custom_call.1} parent=1 // loop_header
      %s15 = sphi 0, %s19
      %p16 = scmp.ge.s32.totalorder %s15, 4
      %s25 = sphi 0, %s27
      %s28 = sphi 0, %s25
      %s29 = sphi 0, %s28
      %s45 = sphi 0, %s29
      %s51 = sphi 0, %s53
      %s54 = sphi 0, %s51
      %s55 = sphi 0, %s54
      %s71 = sphi 0, %s55
    $region4: #{tpu_custom_call.1} parent=1 // loop_header_branch
      %18 = sbr.rel (%p16) target = $region8
    $region5: #{tpu_custom_call.1} parent=1 // loop_body
      %s20 = ssub.s32 %s15, 1
      %s21 = ssub.s32 %s15, 2
      %s22 = sadd.s32 %s15, 1
      %s23 = ssub.s32 %s15, %s22
      %p24 = scmp.eq.s32.totalorder %s23, 0
      %s26 = sadd.s32 %s25, 1
      %s27 = scalar_select %p24, %s25, %s26
      %p30 = pneg %p24
      %p31 = scmp.eq.s32.totalorder %s15, 1
      %p32 = por %p30, %p31
      %p33 = scmp.ne.s32.totalorder %s25, %s28
      %p34 = scmp.eq.s32.totalorder %s15, 0
      %p35 = por %p33, %p34
      %p36 = scmp.ne.s32.totalorder %s25, %s28
      %p37 = scmp.eq.s32.totalorder %s20, 1
      %p38 = por %p36, %p37
      %p39 = scmp.ne.s32.totalorder %s28, %s29
      %p40 = scmp.eq.s32.totalorder %s20, 0
      %p41 = por %p39, %p40
      %p42 = scmp.ne.s32.totalorder %s28, %s29
      %p43 = scmp.eq.s32.totalorder %s21, 1
      %p44 = por %p42, %p43
      %p46 = scmp.ne.s32.totalorder %s29, %s45
      %p47 = scmp.eq.s32.totalorder %s21, 0
      %p48 = por %p46, %p47
      %s49 = ssub.s32 %s15, %s22
      %p50 = scmp.eq.s32.totalorder %s49, 0
      %s52 = sadd.s32 %s51, 1
      %s53 = scalar_select %p50, %s51, %s52
      %p56 = pneg %p50
      %p57 = scmp.eq.s32.totalorder %s15, 1
      %p58 = por %p56, %p57
      %p59 = scmp.ne.s32.totalorder %s51, %s54
      %p60 = scmp.eq.s32.totalorder %s15, 0
      %p61 = por %p59, %p60
      %p62 = scmp.ne.s32.totalorder %s51, %s54
      %p63 = scmp.eq.s32.totalorder %s20, 1
      %p64 = por %p62, %p63
      %p65 = scmp.ne.s32.totalorder %s54, %s55
      %p66 = scmp.eq.s32.totalorder %s20, 0
      %p67 = por %p65, %p66
      %p68 = scmp.ne.s32.totalorder %s54, %s55
      %p69 = scmp.eq.s32.totalorder %s21, 1
      %p70 = por %p68, %p69
      %p72 = scmp.ne.s32.totalorder %s55, %s71
      %p73 = scmp.eq.s32.totalorder %s21, 0
      %p74 = por %p72, %p73
      %p75 = scmp.le.s32.totalorder 1, %s15
      %p76 = scmp.lt.s32.totalorder %s15, 3
      %p77 = pnand %p75, %p76
      %p78 = pneg %p77
      // Predicated region
      $region9: #{tpu_custom_call.1} parent=5 // pred_check
        _
      $region10: #{tpu_custom_call.1} parent=5 // pred_check_branch
        %80 = sbr.rel (%p77) target = $region12
      $region11: #{tpu_custom_call.1} parent=5 // pred_region
        %s81 = ssub.s32 %s15, 1
      $region12: #{tpu_custom_call.1} parent=5 // pred_fallthru
        _
      %p82 = scmp.lt.s32.totalorder %s15, 2
      // Predicated region
      $region13: #{tpu_custom_call.1} parent=5 // pred_check
        %p83 = pneg %p82
      $region14: #{tpu_custom_call.1} parent=5 // pred_check_branch
        %85 = sbr.rel (%p83) target = $region16
      $region15: #{tpu_custom_call.1} parent=5 // pred_region
        // Predicated region
        $region17: #{tpu_custom_call.1} parent=15 // pred_check
          %p86 = pneg %p35
        $region18: #{tpu_custom_call.1} parent=15 // pred_check_branch
          %88 = sbr.rel (%p86) target = $region20
        $region19: #{tpu_custom_call.1} parent=15 // pred_region
          %s89 = sand.u32 %s25, 1
          %s90 = scalar_lea.sflag [#allocation5], %s89
          %s91 = sand.u32 %s25, 1
          %s92 = smul.addr %s91, 128
          %s93 = scalar_lea.vmem [#allocation4], %s92
          %s94 = smul.u32 2, %s15
          %96 = vsyncadd %s90, 0
          %s97 = smul.addr %s94, 8
          %s98 = smul.addr %s97, 8
          %s99 = scalar_lea.hbm %s1, %s98
          %s100 = sshll.u32 %s99, 4
          %s101 = int_to_ptr.hbm [resolvable:$true] %s100
          %s102 = sshll.u32 %s93, 4
          %s103 = int_to_ptr.vmem [resolvable:$true] %s102
          %108 = dma.hbm_to_vmem [thread:$0]  %s101, 2048, %s103, %s90, 1024, 1024, 64
        $region20: #{tpu_custom_call.1} parent=15 // pred_fallthru
          _
      $region16: #{tpu_custom_call.1} parent=5 // pred_fallthru
        _
      %p109 = scmp.le.s32.totalorder 1, %s15
      %p110 = scmp.lt.s32.totalorder %s15, 3
      %p111 = pnand %p109, %p110
      %p112 = pneg %p111
      // Predicated region
      $region21: #{tpu_custom_call.1} parent=5 // pred_check
        _
      $region22: #{tpu_custom_call.1} parent=5 // pred_check_branch
        %114 = sbr.rel (%p111) target = $region24
      $region23: #{tpu_custom_call.1} parent=5 // pred_region
        %s115 = ssub.s32 %s15, 1
        %s116 = sand.u32 %s28, 1
        %s117 = scalar_lea.sflag [#allocation5], %s116
        %s118 = sand.u32 %s28, 1
        %s119 = smul.addr %s118, 128
        %s120 = scalar_lea.vmem [#allocation4], %s119
        // Predicated region
        $region25: #{tpu_custom_call.1} parent=23 // pred_check
          %p121 = pneg %p41
        $region26: #{tpu_custom_call.1} parent=23 // pred_check_branch
          %123 = sbr.rel (%p121) target = $region28
        $region27: #{tpu_custom_call.1} parent=23 // pred_region
          %125 = dma.done %s117, 2048
        $region28: #{tpu_custom_call.1} parent=23 // pred_fallthru
          _
        %s126 = sand.u32 %s28, 1
        %s127 = scalar_lea.sflag [#allocation5], %s126
        %s128 = sand.u32 %s28, 1
        %s129 = smul.addr %s128, 128
        %s130 = scalar_lea.vmem [#allocation4], %s129
        %p131 = pneg %p41
        %p132 = pneg %p38
        %p133 = pneg %p67
        %p134 = pneg %p64
        %s135 = sand.u32 %s54, 1
        %s136 = scalar_lea.sflag [#allocation6], %s135
        %s137 = sand.u32 %s54, 1
        %s138 = smul.addr %s137, 128
        %s139 = scalar_lea.vmem [#allocation7], %s138
        %s140 = smul.u32 2, %s20
        %s141 = smul.u32 2, %s20
        %v142 = vlaneseq
        %v143 = vshrl.u32 %v142, 7
        %v144 = vadd.s32 %v143, 8
        %v145 = vlaneseq
        %v146 = vand.u32 %v145, 127
        %v147 = vadd.s32 %v146, 128
        %v148 = vadd.s32 %v146, 256
        %v149 = vadd.s32 %v146, 384
        %v150 = vadd.s32 %v146, 512
        %v151 = vadd.s32 %v146, 640
        %v152 = vadd.s32 %v146, 768
        %v153 = vadd.s32 %v146, 896
        %s154 = smul.u32 %s20, 16
        %v155 = vstv %s154
        %v156 = vadd.s32 %v155, %v143
        %v157 = vadd.s32 %v155, %v144
        %v158 = vmul.u32 %v156, 1024
        %v159 = vmul.u32 %v157, 1024
        %v160 = vadd.s32 %v158, %v146
        %v161 = vadd.s32 %v158, %v147
        %v162 = vadd.s32 %v158, %v148
        %v163 = vadd.s32 %v158, %v149
        %v164 = vadd.s32 %v158, %v150
        %v165 = vadd.s32 %v158, %v151
        %v166 = vadd.s32 %v158, %v152
        %v167 = vadd.s32 %v158, %v153
        %v168 = vadd.s32 %v159, %v146
        %v169 = vadd.s32 %v159, %v147
        %v170 = vadd.s32 %v159, %v148
        %v171 = vadd.s32 %v159, %v149
        %v172 = vadd.s32 %v159, %v150
        %v173 = vadd.s32 %v159, %v151
        %v174 = vadd.s32 %v159, %v152
        %v175 = vadd.s32 %v159, %v153
        %s176 = sld [smem:[#allocation3]]
        %s177 = smul.u32 %s176, 2654435769
        %v178 = vstv %s177
        %v179 = vxor.u32 %v160, %v178
        %v180 = vxor.u32 %v161, %v178
        %v181 = vxor.u32 %v162, %v178
        %v182 = vxor.u32 %v163, %v178
        %v183 = vxor.u32 %v164, %v178
        %v184 = vxor.u32 %v165, %v178
        %v185 = vxor.u32 %v166, %v178
        %v186 = vxor.u32 %v167, %v178
        %v187 = vxor.u32 %v168, %v178
        %v188 = vxor.u32 %v169, %v178
        %v189 = vxor.u32 %v170, %v178
        %v190 = vxor.u32 %v171, %v178
        %v191 = vxor.u32 %v172, %v178
        %v192 = vxor.u32 %v173, %v178
        %v193 = vxor.u32 %v174, %v178
        %v194 = vxor.u32 %v175, %v178
        %v195 = vshrl.u32 %v179, 16
        %v196 = vshrl.u32 %v180, 16
        %v197 = vshrl.u32 %v181, 16
        %v198 = vshrl.u32 %v182, 16
        %v199 = vshrl.u32 %v183, 16
        %v200 = vshrl.u32 %v184, 16
        %v201 = vshrl.u32 %v185, 16
        %v202 = vshrl.u32 %v186, 16
        %v203 = vshrl.u32 %v187, 16
        %v204 = vshrl.u32 %v188, 16
        %v205 = vshrl.u32 %v189, 16
        %v206 = vshrl.u32 %v190, 16
        %v207 = vshrl.u32 %v191, 16
        %v208 = vshrl.u32 %v192, 16
        %v209 = vshrl.u32 %v193, 16
        %v210 = vshrl.u32 %v194, 16
        %v211 = vxor.u32 %v179, %v195
        %v212 = vxor.u32 %v180, %v196
        %v213 = vxor.u32 %v181, %v197
        %v214 = vxor.u32 %v182, %v198
        %v215 = vxor.u32 %v183, %v199
        %v216 = vxor.u32 %v184, %v200
        %v217 = vxor.u32 %v185, %v201
        %v218 = vxor.u32 %v186, %v202
        %v219 = vxor.u32 %v187, %v203
        %v220 = vxor.u32 %v188, %v204
        %v221 = vxor.u32 %v189, %v205
        %v222 = vxor.u32 %v190, %v206
        %v223 = vxor.u32 %v191, %v207
        %v224 = vxor.u32 %v192, %v208
        %v225 = vxor.u32 %v193, %v209
        %v226 = vxor.u32 %v194, %v210
        %v227 = vmul.u32 %v211, 2146121005
        %v228 = vmul.u32 %v212, 2146121005
        %v229 = vmul.u32 %v213, 2146121005
        %v230 = vmul.u32 %v214, 2146121005
        %v231 = vmul.u32 %v215, 2146121005
        %v232 = vmul.u32 %v216, 2146121005
        %v233 = vmul.u32 %v217, 2146121005
        %v234 = vmul.u32 %v218, 2146121005
        %v235 = vmul.u32 %v219, 2146121005
        %v236 = vmul.u32 %v220, 2146121005
        %v237 = vmul.u32 %v221, 2146121005
        %v238 = vmul.u32 %v222, 2146121005
        %v239 = vmul.u32 %v223, 2146121005
        %v240 = vmul.u32 %v224, 2146121005
        %v241 = vmul.u32 %v225, 2146121005
        %v242 = vmul.u32 %v226, 2146121005
        %v243 = vshrl.u32 %v227, 15
        %v244 = vshrl.u32 %v228, 15
        %v245 = vshrl.u32 %v229, 15
        %v246 = vshrl.u32 %v230, 15
        %v247 = vshrl.u32 %v231, 15
        %v248 = vshrl.u32 %v232, 15
        %v249 = vshrl.u32 %v233, 15
        %v250 = vshrl.u32 %v234, 15
        %v251 = vshrl.u32 %v235, 15
        %v252 = vshrl.u32 %v236, 15
        %v253 = vshrl.u32 %v237, 15
        %v254 = vshrl.u32 %v238, 15
        %v255 = vshrl.u32 %v239, 15
        %v256 = vshrl.u32 %v240, 15
        %v257 = vshrl.u32 %v241, 15
        %v258 = vshrl.u32 %v242, 15
        %v259 = vxor.u32 %v227, %v243
        %v260 = vxor.u32 %v228, %v244
        %v261 = vxor.u32 %v229, %v245
        %v262 = vxor.u32 %v230, %v246
        %v263 = vxor.u32 %v231, %v247
        %v264 = vxor.u32 %v232, %v248
        %v265 = vxor.u32 %v233, %v249
        %v266 = vxor.u32 %v234, %v250
        %v267 = vxor.u32 %v235, %v251
        %v268 = vxor.u32 %v236, %v252
        %v269 = vxor.u32 %v237, %v253
        %v270 = vxor.u32 %v238, %v254
        %v271 = vxor.u32 %v239, %v255
        %v272 = vxor.u32 %v240, %v256
        %v273 = vxor.u32 %v241, %v257
        %v274 = vxor.u32 %v242, %v258
        %v275 = vmul.u32 %v259, 2221713035
        %v276 = vmul.u32 %v260, 2221713035
        %v277 = vmul.u32 %v261, 2221713035
        %v278 = vmul.u32 %v262, 2221713035
        %v279 = vmul.u32 %v263, 2221713035
        %v280 = vmul.u32 %v264, 2221713035
        %v281 = vmul.u32 %v265, 2221713035
        %v282 = vmul.u32 %v266, 2221713035
        %v283 = vmul.u32 %v267, 2221713035
        %v284 = vmul.u32 %v268, 2221713035
        %v285 = vmul.u32 %v269, 2221713035
        %v286 = vmul.u32 %v270, 2221713035
        %v287 = vmul.u32 %v271, 2221713035
        %v288 = vmul.u32 %v272, 2221713035
        %v289 = vmul.u32 %v273, 2221713035
        %v290 = vmul.u32 %v274, 2221713035
        %v291 = vshrl.u32 %v275, 16
        %v292 = vshrl.u32 %v276, 16
        %v293 = vshrl.u32 %v277, 16
        %v294 = vshrl.u32 %v278, 16
        %v295 = vshrl.u32 %v279, 16
        %v296 = vshrl.u32 %v280, 16
        %v297 = vshrl.u32 %v281, 16
        %v298 = vshrl.u32 %v282, 16
        %v299 = vshrl.u32 %v283, 16
        %v300 = vshrl.u32 %v284, 16
        %v301 = vshrl.u32 %v285, 16
        %v302 = vshrl.u32 %v286, 16
        %v303 = vshrl.u32 %v287, 16
        %v304 = vshrl.u32 %v288, 16
        %v305 = vshrl.u32 %v289, 16
        %v306 = vshrl.u32 %v290, 16
        %v307 = vxor.u32 %v275, %v291
        %v308 = vxor.u32 %v276, %v292
        %v309 = vxor.u32 %v277, %v293
        %v310 = vxor.u32 %v278, %v294
        %v311 = vxor.u32 %v279, %v295
        %v312 = vxor.u32 %v280, %v296
        %v313 = vxor.u32 %v281, %v297
        %v314 = vxor.u32 %v282, %v298
        %v315 = vxor.u32 %v283, %v299
        %v316 = vxor.u32 %v284, %v300
        %v317 = vxor.u32 %v285, %v301
        %v318 = vxor.u32 %v286, %v302
        %v319 = vxor.u32 %v287, %v303
        %v320 = vxor.u32 %v288, %v304
        %v321 = vxor.u32 %v289, %v305
        %v322 = vxor.u32 %v290, %v306
        %v323 = vadd.s32 %v307, 2147483648
        %vm325 = vcmp.lt.s32.totalorder %v323, 0
        %v326 = vadd.s32 %v308, 2147483648
        %vm328 = vcmp.lt.s32.totalorder %v326, 0
        %v329 = vadd.s32 %v309, 2147483648
        %vm331 = vcmp.lt.s32.totalorder %v329, 0
        %v332 = vadd.s32 %v310, 2147483648
        %vm334 = vcmp.lt.s32.totalorder %v332, 0
        %v335 = vadd.s32 %v311, 2147483648
        %vm337 = vcmp.lt.s32.totalorder %v335, 0
        %v338 = vadd.s32 %v312, 2147483648
        %vm340 = vcmp.lt.s32.totalorder %v338, 0
        %v341 = vadd.s32 %v313, 2147483648
        %vm343 = vcmp.lt.s32.totalorder %v341, 0
        %v344 = vadd.s32 %v314, 2147483648
        %vm346 = vcmp.lt.s32.totalorder %v344, 0
        %v347 = vadd.s32 %v315, 2147483648
        %vm349 = vcmp.lt.s32.totalorder %v347, 0
        %v350 = vadd.s32 %v316, 2147483648
        %vm352 = vcmp.lt.s32.totalorder %v350, 0
        %v353 = vadd.s32 %v317, 2147483648
        %vm355 = vcmp.lt.s32.totalorder %v353, 0
        %v356 = vadd.s32 %v318, 2147483648
        %vm358 = vcmp.lt.s32.totalorder %v356, 0
        %v359 = vadd.s32 %v319, 2147483648
        %vm361 = vcmp.lt.s32.totalorder %v359, 0
        %v362 = vadd.s32 %v320, 2147483648
        %vm364 = vcmp.lt.s32.totalorder %v362, 0
        %v365 = vadd.s32 %v321, 2147483648
        %vm367 = vcmp.lt.s32.totalorder %v365, 0
        %v368 = vadd.s32 %v322, 2147483648
        %vm370 = vcmp.lt.s32.totalorder %v368, 0
        %v371 = vld [vmem:[%s120] sm:$0xff]
        %v372 = vld [vmem:[%s120 + $0x8] sm:$0xff]
        %v373 = vld [vmem:[%s120 + $0x10] sm:$0xff]
        %v374 = vld [vmem:[%s120 + $0x18] sm:$0xff]
        %v375 = vld [vmem:[%s120 + $0x20] sm:$0xff]
        %v376 = vld [vmem:[%s120 + $0x28] sm:$0xff]
        %v377 = vld [vmem:[%s120 + $0x30] sm:$0xff]
        %v378 = vld [vmem:[%s120 + $0x38] sm:$0xff]
        %v379 = vld [vmem:[%s120 + $0x40] sm:$0xff]
        %v380 = vld [vmem:[%s120 + $0x48] sm:$0xff]
        %v381 = vld [vmem:[%s120 + $0x50] sm:$0xff]
        %v382 = vld [vmem:[%s120 + $0x58] sm:$0xff]
        %v383 = vld [vmem:[%s120 + $0x60] sm:$0xff]
        %v384 = vld [vmem:[%s120 + $0x68] sm:$0xff]
        %v385 = vld [vmem:[%s120 + $0x70] sm:$0xff]
        %v386 = vld [vmem:[%s120 + $0x78] sm:$0xff]
        %v387 = vmul.f32 %v371, 2.0
        %v388 = vmul.f32 %v372, 2.0
        %v389 = vmul.f32 %v373, 2.0
        %v390 = vmul.f32 %v374, 2.0
        %v391 = vmul.f32 %v375, 2.0
        %v392 = vmul.f32 %v376, 2.0
        %v393 = vmul.f32 %v377, 2.0
        %v394 = vmul.f32 %v378, 2.0
        %v395 = vmul.f32 %v379, 2.0
        %v396 = vmul.f32 %v380, 2.0
        %v397 = vmul.f32 %v381, 2.0
        %v398 = vmul.f32 %v382, 2.0
        %v399 = vmul.f32 %v383, 2.0
        %v400 = vmul.f32 %v384, 2.0
        %v401 = vmul.f32 %v385, 2.0
        %v402 = vmul.f32 %v386, 2.0
        %v403 = vsel %vm325, %v387, 0.0
        %v404 = vsel %vm328, %v388, 0.0
        %v405 = vsel %vm331, %v389, 0.0
        %v406 = vsel %vm334, %v390, 0.0
        %v407 = vsel %vm337, %v391, 0.0
        %v408 = vsel %vm340, %v392, 0.0
        %v409 = vsel %vm343, %v393, 0.0
        %v410 = vsel %vm346, %v394, 0.0
        %v411 = vsel %vm349, %v395, 0.0
        %v412 = vsel %vm352, %v396, 0.0
        %v413 = vsel %vm355, %v397, 0.0
        %v414 = vsel %vm358, %v398, 0.0
        %v415 = vsel %vm361, %v399, 0.0
        %v416 = vsel %vm364, %v400, 0.0
        %v417 = vsel %vm367, %v401, 0.0
        %v418 = vsel %vm370, %v402, 0.0
        %419 = vst [vmem:[%s139] sm:$0xff] %v403
        %420 = vst [vmem:[%s139 + $0x8] sm:$0xff] %v404
        %421 = vst [vmem:[%s139 + $0x10] sm:$0xff] %v405
        %422 = vst [vmem:[%s139 + $0x18] sm:$0xff] %v406
        %423 = vst [vmem:[%s139 + $0x20] sm:$0xff] %v407
        %424 = vst [vmem:[%s139 + $0x28] sm:$0xff] %v408
        %425 = vst [vmem:[%s139 + $0x30] sm:$0xff] %v409
        %426 = vst [vmem:[%s139 + $0x38] sm:$0xff] %v410
        %427 = vst [vmem:[%s139 + $0x40] sm:$0xff] %v411
        %428 = vst [vmem:[%s139 + $0x48] sm:$0xff] %v412
        %429 = vst [vmem:[%s139 + $0x50] sm:$0xff] %v413
        %430 = vst [vmem:[%s139 + $0x58] sm:$0xff] %v414
        %431 = vst [vmem:[%s139 + $0x60] sm:$0xff] %v415
        %432 = vst [vmem:[%s139 + $0x68] sm:$0xff] %v416
        %433 = vst [vmem:[%s139 + $0x70] sm:$0xff] %v417
        %434 = vst [vmem:[%s139 + $0x78] sm:$0xff] %v418
        %s435 = sand.u32 %s54, 1
        %s436 = scalar_lea.sflag [#allocation6], %s435
        %s437 = sand.u32 %s54, 1
        %s438 = smul.addr %s437, 128
        %s439 = scalar_lea.vmem [#allocation7], %s438
        // Predicated region
        $region29: #{tpu_custom_call.1} parent=23 // pred_check
          %p440 = pneg %p64
        $region30: #{tpu_custom_call.1} parent=23 // pred_check_branch
          %442 = sbr.rel (%p440) target = $region32
        $region31: #{tpu_custom_call.1} parent=23 // pred_region
          %s443 = smul.u32 2, %s20
          %445 = vsyncadd %s436, 0
          %s446 = smul.addr %s443, 8
          %s447 = smul.addr %s446, 8
          %s448 = scalar_lea.hbm %s2, %s447
          %s449 = sshll.u32 %s439, 4
          %s450 = int_to_ptr.vmem [resolvable:$true] %s449
          %s451 = sshll.u32 %s448, 4
          %s452 = int_to_ptr.hbm [resolvable:$true] %s451
          %457 = dma.vmem_to_hbm [thread:$0]  %s450, 2048, %s452, %s436, 1024, 1024, 64
        $region32: #{tpu_custom_call.1} parent=23 // pred_fallthru
          _
      $region24: #{tpu_custom_call.1} parent=5 // pred_fallthru
        _
      %p458 = scmp.le.s32.totalorder 2, %s15
      // Predicated region
      $region33: #{tpu_custom_call.1} parent=5 // pred_check
        %p459 = pneg %p458
      $region34: #{tpu_custom_call.1} parent=5 // pred_check_branch
        %461 = sbr.rel (%p459) target = $region36
      $region35: #{tpu_custom_call.1} parent=5 // pred_region
        %s462 = ssub.s32 %s15, 2
        // Predicated region
        $region37: #{tpu_custom_call.1} parent=35 // pred_check
          %p463 = pneg %p70
        $region38: #{tpu_custom_call.1} parent=35 // pred_check_branch
          %465 = sbr.rel (%p463) target = $region40
        $region39: #{tpu_custom_call.1} parent=35 // pred_region
          %s466 = sand.u32 %s55, 1
          %s467 = scalar_lea.sflag [#allocation6], %s466
          %s468 = sand.u32 %s55, 1
          %s469 = smul.addr %s468, 128
          %s470 = scalar_lea.vmem [#allocation7], %s469
          %472 = dma.done %s467, 2048
        $region40: #{tpu_custom_call.1} parent=35 // pred_fallthru
          _
      $region36: #{tpu_custom_call.1} parent=5 // pred_fallthru
        _
    $region6: #{tpu_custom_call.1} parent=1 // loop_footer
      %s19 = sadd.s32 1, %s15
    $region7: #{tpu_custom_call.1} parent=1 // loop_footer_branch
      %14 = sbr.rel target = $region3
    $region8: #{tpu_custom_call.1} parent=1 // loop_exit
      _
    %473 = vsyncpa [#allocation5], 1
    %s474 = scalar_lea.sflag [#allocation5], 1
    %475 = vsyncpa %s474, 1
    %476 = vsyncpa [#allocation6], 1
    %s477 = scalar_lea.sflag [#allocation6], 1
    %478 = vsyncpa %s477, 1

</llo_original>
